<compile_context>
chip_gen: v7x
topology: tpu7x:2x2x1
jax: 0.10.0
libtpu: 0.0.40
codegen_flags: <defaults>
</compile_context>

<pallas_src>
import functools

import jax
import jax.numpy as jnp
from jax.experimental import pallas as pl
from jax.experimental.pallas import tpu as pltpu


def _round_up(x, m):
    return ((x + m - 1) // m) * m


def _cdiv(a, b):
    return -(-a // b)


def _group_embedding_kernel(ids_ref, fused_ref, out_ref):
    # ids_ref:   (tile_b, n_groups) int32, already offset by g * n_tokens
    # fused_ref: (n_groups * n_tokens, tile_o) in compute dtype (bf16 or f32)
    # out_ref:   (tile_b, tile_o) in out dtype (f32 or bf16)
    ids = ids_ref[...]
    fused = fused_ref[...]
    tb, n_groups = ids.shape
    k_dim = fused.shape[0]

    # Single iota, materialized once per tile.
    iota_k = jax.lax.broadcasted_iota(jnp.int32, (tb, k_dim), 1)

    # Folded one-hot: exactly one hit per group in disjoint k-ranges.
    hit = iota_k == ids[:, 0:1]
    for g in range(1, n_groups):  # n_groups is small & static -> unrolled
        hit = hit | (iota_k == ids[:, g : g + 1])
    one_hot = hit.astype(fused.dtype)  # 0/1 are exact in bf16
    # TODO(synk): if a bundle dump shows the VALU compare/OR path binding, switch
    # iota/ids to int16 (valid while k_dim < 32768) to pack 2 rows/vreg.

    # Single MXU matmul per tile, f32 accumulation.
    out_ref[...] = jnp.dot(
        one_hot, fused, preferred_element_type=jnp.float32
    ).astype(out_ref.dtype)


def fuse_group_embedding_params(table, weight, n_groups, compute_dtype=jnp.bfloat16):
    """Pre-fuse embedding table with the projection. Call ONCE per weight update,
    not per forward:  fused[g*n_tokens + t, o] = sum_i table[t, i] * W[o, g*inner_dim + i].
    The out axis is padded to a multiple of 128 so the kernel's store path stays lane-dense."""
    n_tokens, inner_dim = table.shape
    out_dim = weight.shape[0]
    w3 = weight.reshape(out_dim, n_groups, inner_dim)           # (O, G, I)
    fused = jnp.einsum("ti,ogi->gto", table, w3)                # (G, T, O) in f32
    fused = fused.reshape(n_groups * n_tokens, out_dim)
    out_pad = _round_up(out_dim, 128)
    if out_pad != out_dim:
        fused = jnp.pad(fused, ((0, 0), (0, out_pad - out_dim)))
    return fused.astype(compute_dtype)


@functools.partial(
    jax.jit,
    static_argnames=("n_tokens", "out_dim", "tile_b", "tile_o", "out_dtype"),
)
def group_embedding_forward(
    x_ids, fused, *, n_tokens, out_dim, tile_b=1024, tile_o=512, out_dtype=jnp.float32
):
    """x_ids: (..., n_groups) integer ids.
    fused:  (n_groups*n_tokens, out_dim_padded) from fuse_group_embedding_params.
    Returns (..., out_dim) in out_dtype."""
    *lead, n_groups = x_ids.shape
    k_dim, out_pad = fused.shape
    assert k_dim == n_groups * n_tokens, (k_dim, n_groups, n_tokens)
    assert out_pad % 128 == 0 and out_pad >= out_dim

    ids_flat = x_ids.reshape(-1, n_groups).astype(jnp.int32)
    B = ids_flat.shape[0]

    # Fold the per-group offset so the kernel compares against one wide iota.
    ids_off = ids_flat + (jnp.arange(n_groups, dtype=jnp.int32) * n_tokens)[None, :]

    # Batch tiling: big tiles to amortize per-step overhead, but always >= 2 tiles
    # so the "parallel" axis shards across v7x's two TensorCores.
    n_tiles_b = max(2, _cdiv(B, tile_b))
    tile = _round_up(_cdiv(B, n_tiles_b), 8)
    b_pad = n_tiles_b * tile
    if b_pad != B:
        # Pad rows use id 0 (always in range); their outputs are sliced off below.
        ids_off = jnp.pad(ids_off, ((0, b_pad - B), (0, 0)))

    # out_dim tiling (second "parallel" axis) keeps the resident fused tile bounded.
    t_o = min(_round_up(tile_o, 128), out_pad)
    o_pad = _round_up(out_pad, t_o)
    if o_pad != out_pad:
        fused = jnp.pad(fused, ((0, 0), (0, o_pad - out_pad)))
    n_tiles_o = o_pad // t_o
    # TODO(synk): for very large n_tokens*out_dim (v7x VMEM), add K tiling with an
    # "arbitrary" axis + f32 accumulator, or keep fused in HBM (pl.ANY) and DMA once.

    f_item = jnp.dtype(fused.dtype).itemsize
    o_item = jnp.dtype(out_dtype).itemsize

    # Per-step VMEM estimate (x2 for double buffering); raise scoped limit only if needed.
    vmem_est = 2 * (tile * 128 * 4 + k_dim * t_o * f_item + tile * t_o * o_item)
    cp_kwargs = {"dimension_semantics": ("parallel", "parallel")}
    if vmem_est > (30 << 20):
        cp_kwargs["vmem_limit_bytes"] = int(min(vmem_est * 5 // 4, 100 << 20))

    cost = pl.CostEstimate(
        flops=2 * b_pad * k_dim * o_pad,
        transcendentals=0,
        bytes_accessed=(
            b_pad * n_groups * 4
            + n_tiles_b * k_dim * o_pad * f_item  # fused may re-stream per batch tile
            + b_pad * o_pad * o_item
        ),
    )

    out = pl.pallas_call(
        _group_embedding_kernel,
        out_shape=jax.ShapeDtypeStruct((b_pad, o_pad), out_dtype),
        grid_spec=pltpu.PrefetchScalarGridSpec(
            num_scalar_prefetch=0,
            grid=(n_tiles_b, n_tiles_o),
            in_specs=[
                pl.BlockSpec((tile, n_groups), lambda i, j: (i, 0)),
                pl.BlockSpec((k_dim, t_o), lambda i, j: (0, j)),
            ],
            out_specs=pl.BlockSpec((tile, t_o), lambda i, j: (i, j)),
        ),
        compiler_params=pltpu.CompilerParams(**cp_kwargs),
        cost_estimate=cost,
    )(ids_off, fused)

    return out[:B, :out_dim].reshape(*lead, out_dim)


def _reference_forward(x_ids, table, weight):
    n_groups = x_ids.shape[-1]
    inner_dim = table.shape[1]
    emb = table[x_ids]                                           # (..., n_groups, inner_dim)
    flat = emb.reshape(*x_ids.shape[:-1], n_groups * inner_dim)
    return flat @ weight.T                                       # no bias


if __name__ == "__main__":
    # Small shapes consistent with the module.
    n_tokens, n_groups, inner_dim, out_dim = 64, 4, 128, 128

    key = jax.random.PRNGKey(0)
    k_ids, k_emb, k_w, k_ids2 = jax.random.split(key, 4)

    # nn.Embedding default init: N(0, 1)
    table = jax.random.normal(k_emb, (n_tokens, inner_dim), dtype=jnp.float32)
    # nn.Linear default init: U(-1/sqrt(fan_in), 1/sqrt(fan_in))
    fan_in = n_groups * inner_dim
    bound = 1.0 / (fan_in ** 0.5)
    weight = jax.random.uniform(
        k_w, (out_dim, fan_in), dtype=jnp.float32, minval=-bound, maxval=bound
    )

    # Fusion hoisted out of the per-forward path (once per weight update).
    fused_f32 = fuse_group_embedding_params(table, weight, n_groups, compute_dtype=jnp.float32)
    fused_bf16 = fuse_group_embedding_params(table, weight, n_groups, compute_dtype=jnp.bfloat16)

    # Check 1: f32 operands + f32 output, tight tolerance (batch=2, seq=8 -> B=16).
    x1 = jax.random.randint(k_ids, (2, 8, n_groups), 0, n_tokens, dtype=jnp.int32)
    out1 = jax.block_until_ready(
        group_embedding_forward(x1, fused_f32, n_tokens=n_tokens, out_dim=out_dim)
    )
    ref1 = _reference_forward(x1, table, weight)
    assert out1.shape == (2, 8, out_dim), out1.shape
    assert jnp.allclose(out1, ref1, atol=1e-4, rtol=1e-4), float(
        jnp.abs(out1 - ref1).max()
    )

    # Check 2: bf16 operands + bf16 writeback, ragged batch (B=21 exercises padding
    # and the >=2-tile grid).
    x2 = jax.random.randint(k_ids2, (3, 7, n_groups), 0, n_tokens, dtype=jnp.int32)
    out2 = jax.block_until_ready(
        group_embedding_forward(
            x2, fused_bf16, n_tokens=n_tokens, out_dim=out_dim, out_dtype=jnp.bfloat16
        )
    )
    ref2 = _reference_forward(x2, table, weight)
    assert out2.shape == (3, 7, out_dim), out2.shape
    assert jnp.allclose(out2.astype(jnp.float32), ref2, atol=3e-2, rtol=3e-2), float(
        jnp.abs(out2.astype(jnp.float32) - ref2).max()
    )

    print("KERNEL_OK")
</pallas_src>

<mosaic_0001>
module attributes {stable_mosaic.version = 11 : i64} {
  func.func @_group_embedding_kernel(%arg0: i32, %arg1: i32, %arg2: memref<8x4xi32, #tpu.memory_space<vmem>>, %arg3: memref<256x128xf32, #tpu.memory_space<vmem>>, %arg4: memref<8x128xf32, #tpu.memory_space<vmem>>) attributes {dimension_semantics = [#tpu.dimension_semantics<parallel>, #tpu.dimension_semantics<parallel>], iteration_bounds = array<i64: 2, 1>, scalar_prefetch = 0 : i64, scratch_operands = 0 : i64, tpu.core_type = #tpu.core_type<tc>, window_params = [{transform_indices = @transform_0, window_bounds = array<i64: 8, 4>}, {transform_indices = @transform_1, window_bounds = array<i64: 256, 128>}, {transform_indices = @transform_2, window_bounds = array<i64: 8, 128>}]} {
    %c0 = arith.constant 0 : index
    %c0_0 = arith.constant 0 : index
    %0 = vector.load %arg2[%c0, %c0_0] : memref<8x4xi32, #tpu.memory_space<vmem>>, vector<8x4xi32>
    %c0_1 = arith.constant 0 : index
    %c0_2 = arith.constant 0 : index
    %1 = vector.load %arg3[%c0_1, %c0_2] : memref<256x128xf32, #tpu.memory_space<vmem>>, vector<256x128xf32>
    %2 = tpu.iota {dimensions = array<i32: 1>} : vector<8x256xi32>
    %3 = vector.extract_strided_slice %0 {offsets = [0, 0], sizes = [8, 1], strides = [1, 1]} : vector<8x4xi32> to vector<8x1xi32>
    %4 = vector.broadcast %3 : vector<8x1xi32> to vector<8x256xi32>
    %5 = arith.cmpi eq, %2, %4 : vector<8x256xi32>
    %6 = vector.extract_strided_slice %0 {offsets = [0, 1], sizes = [8, 1], strides = [1, 1]} : vector<8x4xi32> to vector<8x1xi32>
    %7 = vector.broadcast %6 : vector<8x1xi32> to vector<8x256xi32>
    %8 = arith.cmpi eq, %2, %7 : vector<8x256xi32>
    %9 = arith.ori %5, %8 : vector<8x256xi1>
    %10 = vector.extract_strided_slice %0 {offsets = [0, 2], sizes = [8, 1], strides = [1, 1]} : vector<8x4xi32> to vector<8x1xi32>
    %11 = vector.broadcast %10 : vector<8x1xi32> to vector<8x256xi32>
    %12 = arith.cmpi eq, %2, %11 : vector<8x256xi32>
    %13 = arith.ori %9, %12 : vector<8x256xi1>
    %14 = vector.extract_strided_slice %0 {offsets = [0, 3], sizes = [8, 1], strides = [1, 1]} : vector<8x4xi32> to vector<8x1xi32>
    %15 = vector.broadcast %14 : vector<8x1xi32> to vector<8x256xi32>
    %16 = arith.cmpi eq, %2, %15 : vector<8x256xi32>
    %17 = arith.ori %13, %16 : vector<8x256xi1>
    %18 = arith.extui %17 : vector<8x256xi1> to vector<8x256xi32>
    %19 = arith.sitofp %18 : vector<8x256xi32> to vector<8x256xf32>
    %cst = arith.constant dense<0.000000e+00> : vector<8x128xf32>
    %20 = tpu.matmul %19, %1, %cst {dimension_numbers = #tpu.dot_dimension_numbers<[1], [0], [0], [1], [0, 0, 1, 1], [], []>} : vector<8x256xf32>, vector<256x128xf32>, vector<8x128xf32> -> vector<8x128xf32>
    %c0_3 = arith.constant 0 : index
    %c0_4 = arith.constant 0 : index
    %21 = vector.load %arg4[%c0_3, %c0_4] : memref<8x128xf32, #tpu.memory_space<vmem>>, vector<8x128xf32>
    tpu.vector_store %arg4[%c0_3, %c0_4], %20 {strides = array<i32>} : memref<8x128xf32, #tpu.memory_space<vmem>>, vector<8x128xf32>,
    return
  }
  func.func @transform_0(%arg0: i32, %arg1: i32) -> (i32, i32) {
    %c0_i32 = arith.constant 0 : i32
    %c0_i32_0 = arith.constant 0 : i32
    return %arg0, %c0_i32 : i32, i32
  }
  func.func @transform_1(%arg0: i32, %arg1: i32) -> (i32, i32) {
    %c0_i32 = arith.constant 0 : i32
    %c0_i32_0 = arith.constant 0 : i32
    return %c0_i32, %arg1 : i32, i32
  }
  func.func @transform_2(%arg0: i32, %arg1: i32) -> (i32, i32) {
    %c0_i32 = arith.constant 0 : i32
    return %arg0, %arg1 : i32, i32
  }
}

</mosaic_0001>

<llo_original>
// kernel: group_embedding_forward.1
$region0: #{group_embedding_forward.1}
  #allocation0 [shape = 'u32[]', space=smem, size = 0x4, offset = 0x4, fixed_abs, tag = 'smem constant byte address 0x4 - core index']
  #allocation1 [shape = 'u32[144,128]{1,0:T(1,128)}', space=vmem, size = 0x12000, scoped, tag = 'internal scratch']
  %s0 = inlined_call_operand.vmem [shape: s32[16,4], index: 0, kind: input, shape index: {}]
  %s1 = inlined_call_operand.hbm [shape: f32[256,128], index: 1, kind: input, shape index: {}]
  %s2 = inlined_call_operand.hbm [shape: f32[16,128], index: 2, kind: output, shape index: {}]
  %s3 = sld [smem:[#allocation0]]
  $region45: #{group_embedding_forward.1} parent=0
    _
  %s5 = ssub.s32 1, %s3
  %s6 = scalar_select 0, %s5, %s3
  $region1: #{group_embedding_forward.1} parent=0
    #allocation2 [shape = 'u8[131072]{0}', space=vmem, size = 0x20000, scoped, tag = 'input window, operand 1, single buffered']
    #allocation3 [shape = 's32[2]{0}', space=sflag, size = 0x8, scoped, tag = 'scoped memory for group_embedding_forward.1']
    #allocation4 [shape = 's32[2]{0}', space=sflag, size = 0x8, scoped, tag = 'scoped memory for group_embedding_forward.1']
    #allocation5 [shape = 'u8[8192]{0}', space=vmem, size = 0x2000, scoped, tag = 'output window, operand 0']
    %7 = vsyncpa [#allocation3], 0
    %8 = vsyncpa [#allocation4], 0
    %s9 = scalar_lea.sflag [#allocation4], 1
    %10 = vsyncpa %s9, 0
    loop: start=0, step=1, limit=4
    $region2: #{group_embedding_forward.1} parent=1 // loop_pre_header
      _
    $region3: #{group_embedding_forward.1} parent=1 // loop_header
      %s12 = sphi 0, %s16
      %p13 = scmp.ge.s32.totalorder %s12, 4
      %s19 = sphi 0, %s31
      %s20 = sphi 0, %s27
      %s21 = sphi 0, %s19
      %s22 = sphi 0, %s20
      %s23 = sphi 0, %s21
      %s24 = sphi 0, %s22
      %s34 = sphi 0, %s36
      %s37 = sphi 0, %s34
      %s38 = sphi 0, %s37
      %s54 = sphi 0, %s38
      %s60 = sphi 0, %s62
      %s63 = sphi 0, %s60
      %s64 = sphi 0, %s63
      %s80 = sphi 0, %s64
      %s88 = sphi 0, %s90
      %s91 = sphi 0, %s88
      %s92 = sphi 0, %s91
      %s108 = sphi 0, %s92
    $region4: #{group_embedding_forward.1} parent=1 // loop_header_branch
      %15 = sbr.rel (%p13) target = $region8
    $region5: #{group_embedding_forward.1} parent=1 // loop_body
      %s17 = ssub.s32 %s12, 1
      %s18 = ssub.s32 %s12, 2
      %s25 = sadd.s32 1, %s20
      %p26 = scmp.ge.s32.totalorder %s25, 1
      %s27 = scalar_select %p26, 0, %s25
      %s28 = sadd.s32 1, %s19
      %s29 = scalar_select %p26, %s28, %s19
      %p30 = scmp.ge.s32.totalorder %s29, 2
      %s31 = scalar_select %p30, 0, %s29
      %s32 = ssub.s32 %s19, %s31
      %p33 = scmp.eq.s32.totalorder %s32, 0
      %s35 = sadd.s32 %s34, 1
      %s36 = scalar_select %p33, %s34, %s35
      %p39 = pneg %p33
      %p40 = scmp.eq.s32.totalorder %s12, 1
      %p41 = por %p39, %p40
      %p42 = scmp.ne.s32.totalorder %s34, %s37
      %p43 = scmp.eq.s32.totalorder %s12, 0
      %p44 = por %p42, %p43
      %p45 = scmp.ne.s32.totalorder %s34, %s37
      %p46 = scmp.eq.s32.totalorder %s17, 1
      %p47 = por %p45, %p46
      %p48 = scmp.ne.s32.totalorder %s37, %s38
      %p49 = scmp.eq.s32.totalorder %s17, 0
      %p50 = por %p48, %p49
      %p51 = scmp.ne.s32.totalorder %s37, %s38
      %p52 = scmp.eq.s32.totalorder %s18, 1
      %p53 = por %p51, %p52
      %p55 = scmp.ne.s32.totalorder %s38, %s54
      %p56 = scmp.eq.s32.totalorder %s18, 0
      %p57 = por %p55, %p56
      %s58 = ssub.s32 %s20, %s27
      %p59 = scmp.eq.s32.totalorder %s58, 0
      %s61 = sadd.s32 %s60, 1
      %s62 = scalar_select %p59, %s60, %s61
      %p65 = pneg %p59
      %p66 = scmp.eq.s32.totalorder %s12, 1
      %p67 = por %p65, %p66
      %p68 = scmp.ne.s32.totalorder %s60, %s63
      %p69 = scmp.eq.s32.totalorder %s12, 0
      %p70 = por %p68, %p69
      %p71 = scmp.ne.s32.totalorder %s60, %s63
      %p72 = scmp.eq.s32.totalorder %s17, 1
      %p73 = por %p71, %p72
      %p74 = scmp.ne.s32.totalorder %s63, %s64
      %p75 = scmp.eq.s32.totalorder %s17, 0
      %p76 = por %p74, %p75
      %p77 = scmp.ne.s32.totalorder %s63, %s64
      %p78 = scmp.eq.s32.totalorder %s18, 1
      %p79 = por %p77, %p78
      %p81 = scmp.ne.s32.totalorder %s64, %s80
      %p82 = scmp.eq.s32.totalorder %s18, 0
      %p83 = por %p81, %p82
      %s84 = ssub.s32 %s19, %s31
      %s85 = ssub.s32 %s20, %s27
      %s86 = sor.u32 %s84, %s85
      %p87 = scmp.eq.s32.totalorder %s86, 0
      %s89 = sadd.s32 %s88, 1
      %s90 = scalar_select %p87, %s88, %s89
      %p93 = pneg %p87
      %p94 = scmp.eq.s32.totalorder %s12, 1
      %p95 = por %p93, %p94
      %p96 = scmp.ne.s32.totalorder %s88, %s91
      %p97 = scmp.eq.s32.totalorder %s12, 0
      %p98 = por %p96, %p97
      %p99 = scmp.ne.s32.totalorder %s88, %s91
      %p100 = scmp.eq.s32.totalorder %s17, 1
      %p101 = por %p99, %p100
      %p102 = scmp.ne.s32.totalorder %s91, %s92
      %p103 = scmp.eq.s32.totalorder %s17, 0
      %p104 = por %p102, %p103
      %p105 = scmp.ne.s32.totalorder %s91, %s92
      %p106 = scmp.eq.s32.totalorder %s18, 1
      %p107 = por %p105, %p106
      %p109 = scmp.ne.s32.totalorder %s92, %s108
      %p110 = scmp.eq.s32.totalorder %s18, 0
      %p111 = por %p109, %p110
      %p112 = scmp.le.s32.totalorder 1, %s12
      %p113 = scmp.lt.s32.totalorder %s12, 3
      %p114 = pnand %p112, %p113
      %p115 = pneg %p114
      // Predicated region
      $region9: #{group_embedding_forward.1} parent=5 // pred_check
        _
      $region10: #{group_embedding_forward.1} parent=5 // pred_check_branch
        %117 = sbr.rel (%p114) target = $region12
      $region11: #{group_embedding_forward.1} parent=5 // pred_region
        %s118 = ssub.s32 %s12, 1
        // Predicated region
        $region13: #{group_embedding_forward.1} parent=11 // pred_check
          %p119 = pneg %p76
        $region14: #{group_embedding_forward.1} parent=11 // pred_check_branch
          %121 = sbr.rel (%p119) target = $region16
        $region15: #{group_embedding_forward.1} parent=11 // pred_region
          %s123 = ssub.s32 4096, 4096
          %124 = vsyncadd [#allocation3], %s123
          %s125 = smul.addr %s22, 128
          %s126 = scalar_lea.hbm %s1, %s125
          %s127 = sshll.u32 [#allocation2], 4
          %s128 = int_to_ptr.vmem [resolvable:$true] %s127
          %133 = dma.hbm_to_vmem [thread:$0]  %s126, 4096, %s128, [#allocation3], 128, 128, 8
        $region16: #{group_embedding_forward.1} parent=11 // pred_fallthru
          _
      $region12: #{group_embedding_forward.1} parent=5 // pred_fallthru
        _
      %p134 = scmp.lt.s32.totalorder %s12, 2
      // Predicated region
      $region17: #{group_embedding_forward.1} parent=5 // pred_check
        %p135 = pneg %p134
      $region18: #{group_embedding_forward.1} parent=5 // pred_check_branch
        %137 = sbr.rel (%p135) target = $region20
      $region19: #{group_embedding_forward.1} parent=5 // pred_region
        // Predicated region
        $region21: #{group_embedding_forward.1} parent=19 // pred_check
          %p138 = pneg %p44
        $region22: #{group_embedding_forward.1} parent=19 // pred_check_branch
          %140 = sbr.rel (%p138) target = $region24
        $region23: #{group_embedding_forward.1} parent=19 // pred_region
          %p141 = scmp.lt.s32.totalorder %s19, 1
          %s142 = scalar_select %p141, %s19, 1
          %s143 = smul.addr %s142, 8
          %s144 = scalar_lea.vmem %s0, %s143
        $region24: #{group_embedding_forward.1} parent=19 // pred_fallthru
          _
      $region20: #{group_embedding_forward.1} parent=5 // pred_fallthru
        _
      %p145 = scmp.le.s32.totalorder 1, %s12
      %p146 = scmp.lt.s32.totalorder %s12, 3
      %p147 = pnand %p145, %p146
      %p148 = pneg %p147
      // Predicated region
      $region25: #{group_embedding_forward.1} parent=5 // pred_check
        _
      $region26: #{group_embedding_forward.1} parent=5 // pred_check_branch
        %150 = sbr.rel (%p147) target = $region28
      $region27: #{group_embedding_forward.1} parent=5 // pred_region
        %s151 = ssub.s32 %s12, 1
        // Predicated region
        $region29: #{group_embedding_forward.1} parent=27 // pred_check
          %p152 = pneg %p76
        $region30: #{group_embedding_forward.1} parent=27 // pred_check_branch
          %154 = sbr.rel (%p152) target = $region32
        $region31: #{group_embedding_forward.1} parent=27 // pred_region
          %155 = dma.done [#allocation3], 4096
        $region32: #{group_embedding_forward.1} parent=27 // pred_fallthru
          _
        %p156 = scmp.lt.s32.totalorder %s21, 1
        %s157 = scalar_select %p156, %s21, 1
        %s158 = smul.addr %s157, 8
        %s159 = scalar_lea.vmem %s0, %s158
        %p160 = pneg %p50
        %p161 = pneg %p47
        %p162 = pneg %p76
        %p163 = pneg %p73
        %p164 = pneg %p104
        %p165 = pneg %p101
        %s166 = sand.u32 %s91, 1
        %s167 = scalar_lea.sflag [#allocation4], %s166
        %s168 = sand.u32 %s91, 1
        %s169 = smul.addr %s168, 8
        %s170 = scalar_lea.vmem [#allocation5], %s169
        %p171 = scmp.lt.s32.totalorder %s21, 1
        %s172 = scalar_select %p171, %s21, 1
        %s173 = smul.addr %s172, 8
        %s174 = scalar_lea.vmem %s0, %s173
        %v175 = vld [vmem:[%s174] sm:$0xff]
        %v176 = vld [vmem:[#allocation2] sm:$0xff]
        %v177 = vld [vmem:[#allocation2 + $0x8] sm:$0xff]
        %v178 = vld [vmem:[#allocation2 + $0x10] sm:$0xff]
        %v179 = vld [vmem:[#allocation2 + $0x18] sm:$0xff]
        %v180 = vld [vmem:[#allocation2 + $0x20] sm:$0xff]
        %v181 = vld [vmem:[#allocation2 + $0x28] sm:$0xff]
        %v182 = vld [vmem:[#allocation2 + $0x30] sm:$0xff]
        %v183 = vld [vmem:[#allocation2 + $0x38] sm:$0xff]
        %v184 = vld [vmem:[#allocation2 + $0x40] sm:$0xff]
        %v185 = vld [vmem:[#allocation2 + $0x48] sm:$0xff]
        %v186 = vld [vmem:[#allocation2 + $0x50] sm:$0xff]
        %v187 = vld [vmem:[#allocation2 + $0x58] sm:$0xff]
        %v188 = vld [vmem:[#allocation2 + $0x60] sm:$0xff]
        %v189 = vld [vmem:[#allocation2 + $0x68] sm:$0xff]
        %v190 = vld [vmem:[#allocation2 + $0x70] sm:$0xff]
        %v191 = vld [vmem:[#allocation2 + $0x78] sm:$0xff]
        %v192 = vld [vmem:[#allocation2 + $0x80] sm:$0xff]
        %v193 = vld [vmem:[#allocation2 + $0x88] sm:$0xff]
        %v194 = vld [vmem:[#allocation2 + $0x90] sm:$0xff]
        %v195 = vld [vmem:[#allocation2 + $0x98] sm:$0xff]
        %v196 = vld [vmem:[#allocation2 + $0xa0] sm:$0xff]
        %v197 = vld [vmem:[#allocation2 + $0xa8] sm:$0xff]
        %v198 = vld [vmem:[#allocation2 + $0xb0] sm:$0xff]
        %v199 = vld [vmem:[#allocation2 + $0xb8] sm:$0xff]
        %v200 = vld [vmem:[#allocation2 + $0xc0] sm:$0xff]
        %v201 = vld [vmem:[#allocation2 + $0xc8] sm:$0xff]
        %v202 = vld [vmem:[#allocation2 + $0xd0] sm:$0xff]
        %v203 = vld [vmem:[#allocation2 + $0xd8] sm:$0xff]
        %v204 = vld [vmem:[#allocation2 + $0xe0] sm:$0xff]
        %v205 = vld [vmem:[#allocation2 + $0xe8] sm:$0xff]
        %v206 = vld [vmem:[#allocation2 + $0xf0] sm:$0xff]
        %v207 = vld [vmem:[#allocation2 + $0xf8] sm:$0xff]
        %v208 = vlaneseq
        %v209 = vand.u32 %v208, 127
        %v210 = vadd.s32 %v209, 128
        %211 = vset.pattern.permute.xlu0 0
        %212 = vperm.xlu0 %211, %v175
        %v213 = vpop.permute.xlu0 %212
        %vm214 = vcmp.eq.s32.totalorder %v209, %v213
        %vm215 = vcmp.eq.s32.totalorder %v210, %v213
        %216 = vset.pattern.permute.xlu0 1
        %217 = vperm.xlu0 %216, %v175
        %v218 = vpop.permute.xlu0 %217
        %vm219 = vcmp.eq.s32.totalorder %v209, %v218
        %vm220 = vcmp.eq.s32.totalorder %v210, %v218
        %vm221 = vmor %vm214, %vm219
        %vm222 = vmor %vm215, %vm220
        %223 = vset.pattern.permute.xlu0 2
        %224 = vperm.xlu0 %223, %v175
        %v225 = vpop.permute.xlu0 %224
        %vm226 = vcmp.eq.s32.totalorder %v209, %v225
        %vm227 = vcmp.eq.s32.totalorder %v210, %v225
        %vm228 = vmor %vm221, %vm226
        %vm229 = vmor %vm222, %vm227
        %230 = vset.pattern.permute.xlu0 3
        %231 = vperm.xlu0 %230, %v175
        %v232 = vpop.permute.xlu0 %231
        %vm233 = vcmp.eq.s32.totalorder %v209, %v232
        %vm234 = vcmp.eq.s32.totalorder %v210, %v232
        %vm235 = vmor %vm228, %vm233
        %vm236 = vmor %vm229, %vm234
        %v237 = vsel %vm235, 1, 0
        %v238 = vsel %vm236, 1, 0
        %v239 = vcvt.s32.f32 %v237
        %v240 = vcvt.s32.f32 %v238
        %241 = vmatprep.subr.mxu0 0.0
        %242 = vmatpush1.msra.mxu0 %v176
        %243 = vmatprep.subr.mxu0 0.0
        %244 = vmatpush1.msra.mxu0 %v177
        %245 = vmatprep.subr.mxu0 0.0
        %246 = vmatpush1.msra.mxu0 %v178
        %247 = vmatprep.subr.mxu0 0.0
        %248 = vmatpush1.msra.mxu0 %v179
        %249 = vmatprep.subr.mxu0 0.0
        %250 = vmatpush1.msra.mxu0 %v180
        %251 = vmatprep.subr.mxu0 0.0
        %252 = vmatpush1.msra.mxu0 %v181
        %253 = vmatprep.subr.mxu0 0.0
        %254 = vmatpush1.msra.mxu0 %v182
        %255 = vmatprep.subr.mxu0 0.0
        %256 = vmatpush1.msra.mxu0 %v183
        %257 = vmatprep.subr.mxu0 0.0
        %258 = vmatpush1.msra.mxu0 %v184
        %259 = vmatprep.subr.mxu0 0.0
        %260 = vmatpush1.msra.mxu0 %v185
        %261 = vmatprep.subr.mxu0 0.0
        %262 = vmatpush1.msra.mxu0 %v186
        %263 = vmatprep.subr.mxu0 0.0
        %264 = vmatpush1.msra.mxu0 %v187
        %265 = vmatprep.subr.mxu0 0.0
        %266 = vmatpush1.msra.mxu0 %v188
        %267 = vmatprep.subr.mxu0 0.0
        %268 = vmatpush1.msra.mxu0 %v189
        %269 = vmatprep.subr.mxu0 0.0
        %270 = vmatpush1.msra.mxu0 %v190
        %271 = vmatprep.subr.mxu0 0.0
        %272 = vmatpush1.msra.mxu0 %v191
        %273 = vmatprep.subr.mxu0 0.0
        %274 = vmatpush1.msra.mxu0 %v192
        %275 = vmatprep.subr.mxu0 0.0
        %276 = vmatpush1.msra.mxu0 %v193
        %277 = vmatprep.subr.mxu0 0.0
        %278 = vmatpush1.msra.mxu0 %v194
        %279 = vmatprep.subr.mxu0 0.0
        %280 = vmatpush1.msra.mxu0 %v195
        %281 = vmatprep.subr.mxu0 0.0
        %282 = vmatpush1.msra.mxu0 %v196
        %283 = vmatprep.subr.mxu0 0.0
        %284 = vmatpush1.msra.mxu0 %v197
        %285 = vmatprep.subr.mxu0 0.0
        %286 = vmatpush1.msra.mxu0 %v198
        %287 = vmatprep.subr.mxu0 0.0
        %288 = vmatpush1.msra.mxu0 %v199
        %289 = vmatprep.subr.mxu0 0.0
        %290 = vmatpush1.msra.mxu0 %v200
        %291 = vmatprep.subr.mxu0 0.0
        %292 = vmatpush1.msra.mxu0 %v201
        %293 = vmatprep.subr.mxu0 0.0
        %294 = vmatpush1.msra.mxu0 %v202
        %295 = vmatprep.subr.mxu0 0.0
        %296 = vmatpush1.msra.mxu0 %v203
        %297 = vmatprep.subr.mxu0 0.0
        %298 = vmatpush1.msra.mxu0 %v204
        %299 = vmatprep.subr.mxu0 0.0
        %300 = vmatpush1.msra.mxu0 %v205
        %301 = vmatprep.subr.mxu0 0.0
        %302 = vmatpush1.msra.mxu0 %v206
        %303 = vmatprep.subr.mxu0 0.0
        %304 = vmatpush1.msra.mxu0 %v207
        %305 = vmatprep.mubr.f32.mxu0 %v240
        %306 = vmatmul.mubr.f32.gmra.mrb[0].mxu0 %v239
        %v307 = vpop.f32.mrb[0].mxu0
        %v308 = vadd.f32 0.0, %v307
        %v309 = vpop.f32.mrb[0].mxu0
        %310 = vdwg.mxu0
        %311 = vst [vmem:[%s170] sm:$0xff] %v308
        %s312 = sand.u32 %s91, 1
        %s313 = scalar_lea.sflag [#allocation4], %s312
        %s314 = sand.u32 %s91, 1
        %s315 = smul.addr %s314, 8
        %s316 = scalar_lea.vmem [#allocation5], %s315
        // Predicated region
        $region33: #{group_embedding_forward.1} parent=27 // pred_check
          %p317 = pneg %p101
        $region34: #{group_embedding_forward.1} parent=27 // pred_check_branch
          %319 = sbr.rel (%p317) target = $region36
        $region35: #{group_embedding_forward.1} parent=27 // pred_region
          %s321 = ssub.s32 128, 128
          %322 = vsyncadd %s313, %s321
          %s323 = sadd.s32 %s22, %s21
          %s324 = smul.addr %s323, 128
          %s325 = scalar_lea.hbm %s2, %s324
          %s327 = sshll.u32 %s316, 4
          %s328 = int_to_ptr.vmem [resolvable:$true] %s327
          %330 = dma.vmem_to_hbm [thread:$0]  %s328, 128, %s325, %s313
        $region36: #{group_embedding_forward.1} parent=27 // pred_fallthru
          _
      $region28: #{group_embedding_forward.1} parent=5 // pred_fallthru
        _
      %p331 = scmp.le.s32.totalorder 2, %s12
      // Predicated region
      $region37: #{group_embedding_forward.1} parent=5 // pred_check
        %p332 = pneg %p331
      $region38: #{group_embedding_forward.1} parent=5 // pred_check_branch
        %334 = sbr.rel (%p332) target = $region40
      $region39: #{group_embedding_forward.1} parent=5 // pred_region
        %s335 = ssub.s32 %s12, 2
        // Predicated region
        $region41: #{group_embedding_forward.1} parent=39 // pred_check
          %p336 = pneg %p107
        $region42: #{group_embedding_forward.1} parent=39 // pred_check_branch
          %338 = sbr.rel (%p336) target = $region44
        $region43: #{group_embedding_forward.1} parent=39 // pred_region
          %s339 = sand.u32 %s92, 1
          %s340 = scalar_lea.sflag [#allocation4], %s339
          %s341 = sand.u32 %s92, 1
          %s342 = smul.addr %s341, 8
          %s343 = scalar_lea.vmem [#allocation5], %s342
          %344 = dma.done %s340, 128
        $region44: #{group_embedding_forward.1} parent=39 // pred_fallthru
          _
      $region40: #{group_embedding_forward.1} parent=5 // pred_fallthru
        _
    $region6: #{group_embedding_forward.1} parent=1 // loop_footer
      %s16 = sadd.s32 1, %s12
    $region7: #{group_embedding_forward.1} parent=1 // loop_footer_branch
      %11 = sbr.rel target = $region3
    $region8: #{group_embedding_forward.1} parent=1 // loop_exit
      _
    %345 = vsyncpa [#allocation3], 1
    %s346 = scalar_lea.sflag [#allocation3], 1
    %347 = vsyncpa %s346, 1
    %348 = vsyncpa [#allocation4], 1
    %s349 = scalar_lea.sflag [#allocation4], 1
    %350 = vsyncpa %s349, 1

</llo_original>
